<compile_context>
chip_gen: v6e
topology: v6e:2x2x1
jax: 0.10.0
libtpu: 0.0.40
codegen_flags: <defaults>
</compile_context>

<pallas_src>
import numpy as np
import jax
import jax.numpy as jnp
from jax.experimental import pallas as pl
from jax.experimental.pallas import tpu as pltpu


def _round_up(x: int, m: int) -> int:
    return (x + m - 1) // m * m


# ---------------------------------------------------------------------------
# Host-side parameter construction (torchaudio MelSpectrogram defaults:
# periodic hann window, HTK mel scale, norm=None, power=2.0, center=True,
# reflect padding).
# ---------------------------------------------------------------------------
def hann_window_periodic(win_length: int) -> np.ndarray:
    n = np.arange(win_length, dtype=np.float64)
    return 0.5 - 0.5 * np.cos(2.0 * np.pi * n / win_length)


def windowed_dft_basis(n_fft: int, win_length: int, n_freqs_pad: int) -> np.ndarray:
    """(n_fft, 2*n_freqs_pad) = [win*cos | 0-pad | -win*sin | 0-pad]."""
    n_freqs = n_fft // 2 + 1
    win = np.zeros(n_fft, dtype=np.float64)
    off = (n_fft - win_length) // 2          # torch centers shorter windows in the frame
    win[off:off + win_length] = hann_window_periodic(win_length)
    n = np.arange(n_fft, dtype=np.float64)[:, None]
    k = np.arange(n_freqs, dtype=np.float64)[None, :]
    ang = 2.0 * np.pi * n * k / n_fft
    basis = np.zeros((n_fft, 2 * n_freqs_pad), dtype=np.float32)
    basis[:, :n_freqs] = (np.cos(ang) * win[:, None]).astype(np.float32)
    basis[:, n_freqs_pad:n_freqs_pad + n_freqs] = (-np.sin(ang) * win[:, None]).astype(np.float32)
    return basis


def mel_filterbank_padded(n_freqs: int, n_freqs_pad: int, n_mels: int, n_mels_pad: int,
                          sample_rate: int, f_min: float = 0.0, f_max=None) -> np.ndarray:
    # HTK mel scale, no normalization (torchaudio defaults). Zero-padded to
    # (n_freqs_pad, n_mels_pad) so padded freq rows / mel columns contribute 0.
    if f_max is None:
        f_max = sample_rate / 2.0

    def hz_to_mel(f):
        return 2595.0 * np.log10(1.0 + f / 700.0)

    def mel_to_hz(m):
        return 700.0 * (10.0 ** (m / 2595.0) - 1.0)

    all_freqs = np.linspace(0.0, sample_rate / 2.0, n_freqs)
    m_pts = np.linspace(hz_to_mel(f_min), hz_to_mel(f_max), n_mels + 2)
    f_pts = mel_to_hz(m_pts)
    f_diff = f_pts[1:] - f_pts[:-1]
    slopes = f_pts[None, :] - all_freqs[:, None]
    down = -slopes[:, :-2] / f_diff[:-1]
    up = slopes[:, 2:] / f_diff[1:]
    fb = np.maximum(0.0, np.minimum(down, up))            # (n_freqs, n_mels)
    fb_pad = np.zeros((n_freqs_pad, n_mels_pad), dtype=np.float32)
    fb_pad[:n_freqs, :n_mels] = fb.astype(np.float32)
    return fb_pad


# ---------------------------------------------------------------------------
# Pallas kernel: in-kernel framing (shifted hop-chunk sub-matmuls) -> power
# spectrum -> mel matmul -> log(.+1e-3).   Output is lane-dense (n_mels_pad).
# ---------------------------------------------------------------------------
def _make_mel_kernel(tile_f: int, hop: int, n_shifts: int, n_freqs_pad: int):
    def kernel(chunks_ref, basis_ref, fb_ref, out_ref):
        # chunks_ref: (1, need_chunks, hop)  -- whole clip of batch b, resident
        # basis_ref : (n_fft, 2*n_freqs_pad) -- window folded in
        # fb_ref    : (n_freqs_pad, n_mels_pad)
        # out_ref   : (1, tile_f, n_mels_pad)
        j = pl.program_id(1)
        base = pl.multiple_of(j * tile_f, tile_f)
        acc = None
        for c in range(n_shifts):                              # static unroll (n_fft/hop)
            xc = chunks_ref[0, pl.ds(base + c, tile_f), :]     # (tile_f, hop)
            bc = basis_ref[c * hop:(c + 1) * hop, :]           # (hop, 2*n_freqs_pad)
            part = jnp.dot(xc, bc, preferred_element_type=jnp.float32)
            acc = part if acc is None else acc + part
        real = acc[:, :n_freqs_pad]
        imag = acc[:, n_freqs_pad:]
        power = real * real + imag * imag                      # |X|^2
        mel = jnp.dot(power, fb_ref[...], preferred_element_type=jnp.float32)
        out_ref[0] = jnp.log(mel + 0.001)
    return kernel


def mel_spectrogram_fixed(x, *, sample_rate, n_fft, hop_length, win_length,
                          n_mels, tile_frames=128):
    """x: (B, T) float32 audio -> (B, n_mels, T // hop_length) float32."""
    assert win_length <= n_fft
    # TODO(synk): general hop (n_fft % hop_length != 0) needs a different framing path.
    assert n_fft % hop_length == 0, "kernel requires hop_length to divide n_fft"
    B, T = x.shape
    assert T >= hop_length
    n_freqs = n_fft // 2 + 1
    n_frames_keep = T // hop_length        # torchaudio gives 1 + T//hop; last one dropped
    n_shifts = n_fft // hop_length

    n_freqs_pad = _round_up(n_freqs, 128)
    n_mels_pad = _round_up(n_mels, 128)

    tile_f = min(_round_up(tile_frames, 8), _round_up(n_frames_keep, 8))
    num_tiles = -(-n_frames_keep // tile_f)
    frames_pad = num_tiles * tile_f

    # --- reflect pad (center=True) then a FREE reshape into hop-sized chunks ---
    pad = n_fft // 2
    xp = jnp.pad(x.astype(jnp.float32), ((0, 0), (pad, pad)), mode="reflect")
    need_chunks = frames_pad + n_shifts - 1
    total = need_chunks * hop_length
    cur = T + 2 * pad
    if total > cur:
        xp = jnp.pad(xp, ((0, 0), (0, total - cur)))
    else:
        xp = xp[:, :total]                  # samples beyond `total` are never used
    chunks = xp.reshape(B, need_chunks, hop_length)

    # --- deterministic parameters (window folded into the DFT basis) ---
    basis = jnp.asarray(windowed_dft_basis(n_fft, win_length, n_freqs_pad))
    fb = jnp.asarray(mel_filterbank_padded(n_freqs, n_freqs_pad, n_mels,
                                           n_mels_pad, sample_rate))

    kernel = _make_mel_kernel(tile_f, hop_length, n_shifts, n_freqs_pad)
    out = pl.pallas_call(
        kernel,
        out_shape=jax.ShapeDtypeStruct((B, frames_pad, n_mels_pad), jnp.float32),
        grid_spec=pltpu.PrefetchScalarGridSpec(
            num_scalar_prefetch=0,
            grid=(B, num_tiles),
            in_specs=[
                # whole chunked clip of batch b stays resident across frame tiles
                pl.BlockSpec((1, need_chunks, hop_length), lambda b, j: (b, 0, 0)),
                pl.BlockSpec((n_fft, 2 * n_freqs_pad), lambda b, j: (0, 0)),
                pl.BlockSpec((n_freqs_pad, n_mels_pad), lambda b, j: (0, 0)),
            ],
            out_specs=pl.BlockSpec((1, tile_f, n_mels_pad), lambda b, j: (b, j, 0)),
        ),
        compiler_params=pltpu.CompilerParams(
            dimension_semantics=("parallel", "parallel")),
    )(chunks, basis, fb)

    # crop frame/mel padding, go to PyTorch layout (B, n_mels, n_frames - 1)
    out = out[:, :n_frames_keep, :n_mels]
    return jnp.transpose(out, (0, 2, 1))


if __name__ == "__main__":
    # Small, deterministic example consistent with the module's forward:
    # batch of raw audio waveforms.
    sample_rate = 16000
    n_fft = 64
    hop_length = 16
    win_length = 64
    n_mels = 16
    B, T = 2, 256

    key = jax.random.PRNGKey(0)
    x = jax.random.normal(key, (B, T), dtype=jnp.float32)

    y = mel_spectrogram_fixed(
        x,
        sample_rate=sample_rate,
        n_fft=n_fft,
        hop_length=hop_length,
        win_length=win_length,
        n_mels=n_mels,
    )
    jax.block_until_ready(y)

    expected_frames = 1 + T // hop_length - 1   # last frame dropped
    assert y.shape == (B, n_mels, expected_frames), y.shape
    assert y.dtype == jnp.float32
    assert bool(jnp.all(jnp.isfinite(y)))
    print("KERNEL_OK")
</pallas_src>

<mosaic_0001>
module attributes {stable_mosaic.version = 11 : i64} {
  func.func @kernel(%arg0: i32, %arg1: i32, %arg2: memref<1x19x16xf32, #tpu.memory_space<vmem>>, %arg3: memref<64x256xf32, #tpu.memory_space<vmem>>, %arg4: memref<128x128xf32, #tpu.memory_space<vmem>>, %arg5: memref<1x16x128xf32, #tpu.memory_space<vmem>>) attributes {dimension_semantics = [#tpu.dimension_semantics<parallel>, #tpu.dimension_semantics<parallel>], iteration_bounds = array<i64: 2, 1>, scalar_prefetch = 0 : i64, scratch_operands = 0 : i64, tpu.core_type = #tpu.core_type<tc>, window_params = [{transform_indices = @transform_0, window_bounds = array<i64: 1, 19, 16>}, {pipeline_mode = #tpu.pipeline_mode<synchronous>, transform_indices = @transform_1, window_bounds = array<i64: 64, 256>}, {pipeline_mode = #tpu.pipeline_mode<synchronous>, transform_indices = @transform_2, window_bounds = array<i64: 128, 128>}, {transform_indices = @transform_3, window_bounds = array<i64: 1, 16, 128>}]} {
    %c16_i32 = arith.constant 16 : i32
    %0 = arith.muli %arg1, %c16_i32 : i32
    %1 = tpu.assume_multiple %0, 16 : i32
    %c0_i32 = arith.constant 0 : i32
    %2 = arith.addi %1, %c0_i32 : i32
    %c0 = arith.constant 0 : index
    %3 = arith.index_cast %2 : i32 to index
    %c0_0 = arith.constant 0 : index
    %4 = vector.load %arg2[%c0, %3, %c0_0] : memref<1x19x16xf32, #tpu.memory_space<vmem>>, vector<1x16x16xf32>
    %5 = vector.shape_cast %4 : vector<1x16x16xf32> to vector<16x16xf32>
    %c0_1 = arith.constant 0 : index
    %c0_2 = arith.constant 0 : index
    %6 = vector.load %arg3[%c0_1, %c0_2] : memref<64x256xf32, #tpu.memory_space<vmem>>, vector<16x256xf32>
    %cst = arith.constant dense<0.000000e+00> : vector<16x256xf32>
    %7 = tpu.matmul %5, %6, %cst {dimension_numbers = #tpu.dot_dimension_numbers<[1], [0], [0], [1], [0, 0, 1, 1], [], []>} : vector<16x16xf32>, vector<16x256xf32>, vector<16x256xf32> -> vector<16x256xf32>
    %c1_i32 = arith.constant 1 : i32
    %8 = arith.addi %1, %c1_i32 : i32
    %c0_3 = arith.constant 0 : index
    %9 = arith.index_cast %8 : i32 to index
    %c0_4 = arith.constant 0 : index
    %10 = vector.load %arg2[%c0_3, %9, %c0_4] : memref<1x19x16xf32, #tpu.memory_space<vmem>>, vector<1x16x16xf32>
    %11 = vector.shape_cast %10 : vector<1x16x16xf32> to vector<16x16xf32>
    %c16 = arith.constant 16 : index
    %c0_5 = arith.constant 0 : index
    %12 = vector.load %arg3[%c16, %c0_5] : memref<64x256xf32, #tpu.memory_space<vmem>>, vector<16x256xf32>
    %cst_6 = arith.constant dense<0.000000e+00> : vector<16x256xf32>
    %13 = tpu.matmul %11, %12, %cst_6 {dimension_numbers = #tpu.dot_dimension_numbers<[1], [0], [0], [1], [0, 0, 1, 1], [], []>} : vector<16x16xf32>, vector<16x256xf32>, vector<16x256xf32> -> vector<16x256xf32>
    %14 = arith.addf %7, %13 : vector<16x256xf32>
    %c2_i32 = arith.constant 2 : i32
    %15 = arith.addi %1, %c2_i32 : i32
    %c0_7 = arith.constant 0 : index
    %16 = arith.index_cast %15 : i32 to index
    %c0_8 = arith.constant 0 : index
    %17 = vector.load %arg2[%c0_7, %16, %c0_8] : memref<1x19x16xf32, #tpu.memory_space<vmem>>, vector<1x16x16xf32>
    %18 = vector.shape_cast %17 : vector<1x16x16xf32> to vector<16x16xf32>
    %c32 = arith.constant 32 : index
    %c0_9 = arith.constant 0 : index
    %19 = vector.load %arg3[%c32, %c0_9] : memref<64x256xf32, #tpu.memory_space<vmem>>, vector<16x256xf32>
    %cst_10 = arith.constant dense<0.000000e+00> : vector<16x256xf32>
    %20 = tpu.matmul %18, %19, %cst_10 {dimension_numbers = #tpu.dot_dimension_numbers<[1], [0], [0], [1], [0, 0, 1, 1], [], []>} : vector<16x16xf32>, vector<16x256xf32>, vector<16x256xf32> -> vector<16x256xf32>
    %21 = arith.addf %14, %20 : vector<16x256xf32>
    %c3_i32 = arith.constant 3 : i32
    %22 = arith.addi %1, %c3_i32 : i32
    %c0_11 = arith.constant 0 : index
    %23 = arith.index_cast %22 : i32 to index
    %c0_12 = arith.constant 0 : index
    %24 = vector.load %arg2[%c0_11, %23, %c0_12] : memref<1x19x16xf32, #tpu.memory_space<vmem>>, vector<1x16x16xf32>
    %25 = vector.shape_cast %24 : vector<1x16x16xf32> to vector<16x16xf32>
    %c48 = arith.constant 48 : index
    %c0_13 = arith.constant 0 : index
    %26 = vector.load %arg3[%c48, %c0_13] : memref<64x256xf32, #tpu.memory_space<vmem>>, vector<16x256xf32>
    %cst_14 = arith.constant dense<0.000000e+00> : vector<16x256xf32>
    %27 = tpu.matmul %25, %26, %cst_14 {dimension_numbers = #tpu.dot_dimension_numbers<[1], [0], [0], [1], [0, 0, 1, 1], [], []>} : vector<16x16xf32>, vector<16x256xf32>, vector<16x256xf32> -> vector<16x256xf32>
    %28 = arith.addf %21, %27 : vector<16x256xf32>
    %29 = vector.extract_strided_slice %28 {offsets = [0, 0], sizes = [16, 128], strides = [1, 1]} : vector<16x256xf32> to vector<16x128xf32>
    %30 = vector.extract_strided_slice %28 {offsets = [0, 128], sizes = [16, 128], strides = [1, 1]} : vector<16x256xf32> to vector<16x128xf32>
    %31 = arith.mulf %29, %29 : vector<16x128xf32>
    %32 = arith.mulf %30, %30 : vector<16x128xf32>
    %33 = arith.addf %31, %32 : vector<16x128xf32>
    %c0_15 = arith.constant 0 : index
    %c0_16 = arith.constant 0 : index
    %34 = vector.load %arg4[%c0_15, %c0_16] : memref<128x128xf32, #tpu.memory_space<vmem>>, vector<128x128xf32>
    %cst_17 = arith.constant dense<0.000000e+00> : vector<16x128xf32>
    %35 = tpu.matmul %33, %34, %cst_17 {dimension_numbers = #tpu.dot_dimension_numbers<[1], [0], [0], [1], [0, 0, 1, 1], [], []>} : vector<16x128xf32>, vector<128x128xf32>, vector<16x128xf32> -> vector<16x128xf32>
    %cst_18 = arith.constant 1.000000e-03 : f32
    %36 = vector.broadcast %cst_18 : f32 to vector<16x128xf32>
    %37 = arith.addf %35, %36 : vector<16x128xf32>
    %38 = math.log %37 : vector<16x128xf32>
    %c0_19 = arith.constant 0 : index
    %c0_20 = arith.constant 0 : index
    %c0_21 = arith.constant 0 : index
    %39 = vector.load %arg5[%c0_19, %c0_20, %c0_21] : memref<1x16x128xf32, #tpu.memory_space<vmem>>, vector<1x16x128xf32>
    %40 = vector.shape_cast %39 : vector<1x16x128xf32> to vector<16x128xf32>
    %41 = vector.shape_cast %38 : vector<16x128xf32> to vector<1x16x128xf32>
    tpu.vector_store %arg5[%c0_19, %c0_20, %c0_21], %41 {strides = array<i32>} : memref<1x16x128xf32, #tpu.memory_space<vmem>>, vector<1x16x128xf32>,
    return
  }
  func.func @transform_0(%arg0: i32, %arg1: i32) -> (i32, i32, i32) {
    %c0_i32 = arith.constant 0 : i32
    %c0_i32_0 = arith.constant 0 : i32
    %c0_i32_1 = arith.constant 0 : i32
    return %arg0, %c0_i32, %c0_i32_0 : i32, i32, i32
  }
  func.func @transform_1(%arg0: i32, %arg1: i32) -> (i32, i32) {
    %c0_i32 = arith.constant 0 : i32
    %c0_i32_0 = arith.constant 0 : i32
    %c0_i32_1 = arith.constant 0 : i32
    return %c0_i32, %c0_i32_0 : i32, i32
  }
  func.func @transform_2(%arg0: i32, %arg1: i32) -> (i32, i32) {
    %c0_i32 = arith.constant 0 : i32
    %c0_i32_0 = arith.constant 0 : i32
    %c0_i32_1 = arith.constant 0 : i32
    return %c0_i32, %c0_i32_0 : i32, i32
  }
  func.func @transform_3(%arg0: i32, %arg1: i32) -> (i32, i32, i32) {
    %c0_i32 = arith.constant 0 : i32
    %c0_i32_0 = arith.constant 0 : i32
    return %arg0, %arg1, %c0_i32 : i32, i32, i32
  }
}

</mosaic_0001>

<llo_original>
// kernel: tpu_custom_call.1
$region0: #{tpu_custom_call.1}
  #allocation0 [shape = 'u32[]', space=smem, size = 0x4, offset = 0x4, fixed_abs, tag = 'smem constant byte address 0x4 - core index']
  #allocation1 [shape = 'u32[144,128]{1,0:T(1,128)}', space=vmem, size = 0x12000, scoped, tag = 'internal scratch']
  %s0 = inlined_call_operand.vmem [shape: f32[2,19,16], index: 0, kind: input, shape index: {}]
  %s1 = inlined_call_operand.hbm [shape: f32[64,256], index: 1, kind: input, shape index: {}]
  %s2 = inlined_call_operand.hbm [shape: f32[128,128], index: 2, kind: input, shape index: {}]
  %s3 = inlined_call_operand.hbm [shape: f32[2,16,128], index: 3, kind: output, shape index: {}]
  %s4 = sld [smem:[#allocation0]]
  $region53: #{tpu_custom_call.1} parent=0
    _
  %s6 = ssub.s32 1, %s4
  %s7 = scalar_select 0, %s6, %s4
  $region1: #{tpu_custom_call.1} parent=0
    #allocation2 [shape = 'u8[65536]{0}', space=vmem, size = 0x10000, scoped, tag = 'input window, operand 1, single buffered']
    #allocation3 [shape = 's32[2]{0}', space=sflag, size = 0x8, scoped, tag = 'scoped memory for tpu_custom_call.1']
    #allocation4 [shape = 's32[2]{0}', space=sflag, size = 0x8, scoped, tag = 'scoped memory for tpu_custom_call.1']
    #allocation5 [shape = 'u8[65536]{0}', space=vmem, size = 0x10000, scoped, tag = 'input window, operand 2, single buffered']
    #allocation6 [shape = 's32[1]{0}', space=sflag, size = 0x4, scoped, tag = 'scoped memory for tpu_custom_call.1']
    #allocation7 [shape = 'u8[16384]{0}', space=vmem, size = 0x4000, scoped, tag = 'output window, operand 0']
    %8 = vsyncpa [#allocation3], 0
    %9 = vsyncpa [#allocation6], 0
    %10 = vsyncpa [#allocation4], 0
    %s11 = scalar_lea.sflag [#allocation4], 1
    %12 = vsyncpa %s11, 0
    loop: start=0, step=1, limit=4
    $region2: #{tpu_custom_call.1} parent=1 // loop_pre_header
      _
    $region3: #{tpu_custom_call.1} parent=1 // loop_header
      %s14 = sphi 0, %s18
      %p15 = scmp.ge.s32.totalorder %s14, 4
      %s21 = sphi 0, %s33
      %s22 = sphi 0, %s29
      %s23 = sphi 0, %s21
      %s24 = sphi 0, %s22
      %s25 = sphi 0, %s23
      %s26 = sphi 0, %s24
      %s36 = sphi 0, %s38
      %s39 = sphi 0, %s36
      %s40 = sphi 0, %s39
      %s56 = sphi 0, %s40
      %s60 = sphi 0, %s60
      %s62 = sphi 0, %s60
      %s63 = sphi 0, %s62
      %s77 = sphi 0, %s63
      %s81 = sphi 0, %s81
      %s83 = sphi 0, %s81
      %s84 = sphi 0, %s83
      %s98 = sphi 0, %s84
      %s106 = sphi 0, %s108
      %s109 = sphi 0, %s106
      %s110 = sphi 0, %s109
      %s126 = sphi 0, %s110
    $region4: #{tpu_custom_call.1} parent=1 // loop_header_branch
      %17 = sbr.rel (%p15) target = $region8
    $region5: #{tpu_custom_call.1} parent=1 // loop_body
      %s19 = ssub.s32 %s14, 1
      %s20 = ssub.s32 %s14, 2
      %s27 = sadd.s32 1, %s22
      %p28 = scmp.ge.s32.totalorder %s27, 1
      %s29 = scalar_select %p28, 0, %s27
      %s30 = sadd.s32 1, %s21
      %s31 = scalar_select %p28, %s30, %s21
      %p32 = scmp.ge.s32.totalorder %s31, 2
      %s33 = scalar_select %p32, 0, %s31
      %s34 = ssub.s32 %s21, %s33
      %p35 = scmp.eq.s32.totalorder %s34, 0
      %s37 = sadd.s32 %s36, 1
      %s38 = scalar_select %p35, %s36, %s37
      %p41 = pneg %p35
      %p42 = scmp.eq.s32.totalorder %s14, 1
      %p43 = por %p41, %p42
      %p44 = scmp.ne.s32.totalorder %s36, %s39
      %p45 = scmp.eq.s32.totalorder %s14, 0
      %p46 = por %p44, %p45
      %p47 = scmp.ne.s32.totalorder %s36, %s39
      %p48 = scmp.eq.s32.totalorder %s19, 1
      %p49 = por %p47, %p48
      %p50 = scmp.ne.s32.totalorder %s39, %s40
      %p51 = scmp.eq.s32.totalorder %s19, 0
      %p52 = por %p50, %p51
      %p53 = scmp.ne.s32.totalorder %s39, %s40
      %p54 = scmp.eq.s32.totalorder %s20, 1
      %p55 = por %p53, %p54
      %p57 = scmp.ne.s32.totalorder %s40, %s56
      %p58 = scmp.eq.s32.totalorder %s20, 0
      %p59 = por %p57, %p58
      %s61 = sadd.s32 %s60, 1
      %p64 = scmp.eq.s32.totalorder %s14, 1
      %p65 = scmp.ne.s32.totalorder %s60, %s62
      %p66 = scmp.eq.s32.totalorder %s14, 0
      %p67 = por %p65, %p66
      %p68 = scmp.ne.s32.totalorder %s60, %s62
      %p69 = scmp.eq.s32.totalorder %s19, 1
      %p70 = por %p68, %p69
      %p71 = scmp.ne.s32.totalorder %s62, %s63
      %p72 = scmp.eq.s32.totalorder %s19, 0
      %p73 = por %p71, %p72
      %p74 = scmp.ne.s32.totalorder %s62, %s63
      %p75 = scmp.eq.s32.totalorder %s20, 1
      %p76 = por %p74, %p75
      %p78 = scmp.ne.s32.totalorder %s63, %s77
      %p79 = scmp.eq.s32.totalorder %s20, 0
      %p80 = por %p78, %p79
      %s82 = sadd.s32 %s81, 1
      %p85 = scmp.eq.s32.totalorder %s14, 1
      %p86 = scmp.ne.s32.totalorder %s81, %s83
      %p87 = scmp.eq.s32.totalorder %s14, 0
      %p88 = por %p86, %p87
      %p89 = scmp.ne.s32.totalorder %s81, %s83
      %p90 = scmp.eq.s32.totalorder %s19, 1
      %p91 = por %p89, %p90
      %p92 = scmp.ne.s32.totalorder %s83, %s84
      %p93 = scmp.eq.s32.totalorder %s19, 0
      %p94 = por %p92, %p93
      %p95 = scmp.ne.s32.totalorder %s83, %s84
      %p96 = scmp.eq.s32.totalorder %s20, 1
      %p97 = por %p95, %p96
      %p99 = scmp.ne.s32.totalorder %s84, %s98
      %p100 = scmp.eq.s32.totalorder %s20, 0
      %p101 = por %p99, %p100
      %s102 = ssub.s32 %s21, %s33
      %s103 = ssub.s32 %s22, %s29
      %s104 = sor.u32 %s102, %s103
      %p105 = scmp.eq.s32.totalorder %s104, 0
      %s107 = sadd.s32 %s106, 1
      %s108 = scalar_select %p105, %s106, %s107
      %p111 = pneg %p105
      %p112 = scmp.eq.s32.totalorder %s14, 1
      %p113 = por %p111, %p112
      %p114 = scmp.ne.s32.totalorder %s106, %s109
      %p115 = scmp.eq.s32.totalorder %s14, 0
      %p116 = por %p114, %p115
      %p117 = scmp.ne.s32.totalorder %s106, %s109
      %p118 = scmp.eq.s32.totalorder %s19, 1
      %p119 = por %p117, %p118
      %p120 = scmp.ne.s32.totalorder %s109, %s110
      %p121 = scmp.eq.s32.totalorder %s19, 0
      %p122 = por %p120, %p121
      %p123 = scmp.ne.s32.totalorder %s109, %s110
      %p124 = scmp.eq.s32.totalorder %s20, 1
      %p125 = por %p123, %p124
      %p127 = scmp.ne.s32.totalorder %s110, %s126
      %p128 = scmp.eq.s32.totalorder %s20, 0
      %p129 = por %p127, %p128
      %p130 = scmp.le.s32.totalorder 1, %s14
      %p131 = scmp.lt.s32.totalorder %s14, 3
      %p132 = pnand %p130, %p131
      %p133 = pneg %p132
      // Predicated region
      $region9: #{tpu_custom_call.1} parent=5 // pred_check
        _
      $region10: #{tpu_custom_call.1} parent=5 // pred_check_branch
        %135 = sbr.rel (%p132) target = $region12
      $region11: #{tpu_custom_call.1} parent=5 // pred_region
        %s136 = ssub.s32 %s14, 1
        // Predicated region
        $region13: #{tpu_custom_call.1} parent=11 // pred_check
          %p137 = pneg %p73
        $region14: #{tpu_custom_call.1} parent=11 // pred_check_branch
          %139 = sbr.rel (%p137) target = $region16
        $region15: #{tpu_custom_call.1} parent=11 // pred_region
          %s141 = ssub.s32 2048, 2048
          %142 = vsyncadd [#allocation3], %s141
          %s143 = sshll.u32 [#allocation2], 4
          %s144 = int_to_ptr.vmem [resolvable:$true] %s143
          %149 = dma.hbm_to_vmem [thread:$0]  %s1, 2048, %s144, [#allocation3], 256, 256, 16
        $region16: #{tpu_custom_call.1} parent=11 // pred_fallthru
          _
        // Predicated region
        $region17: #{tpu_custom_call.1} parent=11 // pred_check
          %p150 = pneg %p94
        $region18: #{tpu_custom_call.1} parent=11 // pred_check_branch
          %152 = sbr.rel (%p150) target = $region20
        $region19: #{tpu_custom_call.1} parent=11 // pred_region
          %s154 = ssub.s32 2048, 2048
          %155 = vsyncadd [#allocation6], %s154
          %s156 = sshll.u32 [#allocation5], 4
          %s157 = int_to_ptr.vmem [resolvable:$true] %s156
          %162 = dma.hbm_to_vmem [thread:$0]  %s2, 2048, %s157, [#allocation6], 128, 128, 8
        $region20: #{tpu_custom_call.1} parent=11 // pred_fallthru
          _
      $region12: #{tpu_custom_call.1} parent=5 // pred_fallthru
        _
      %p163 = scmp.lt.s32.totalorder %s14, 2
      // Predicated region
      $region21: #{tpu_custom_call.1} parent=5 // pred_check
        %p164 = pneg %p163
      $region22: #{tpu_custom_call.1} parent=5 // pred_check_branch
        %166 = sbr.rel (%p164) target = $region24
      $region23: #{tpu_custom_call.1} parent=5 // pred_region
        // Predicated region
        $region25: #{tpu_custom_call.1} parent=23 // pred_check
          %p167 = pneg %p46
        $region26: #{tpu_custom_call.1} parent=23 // pred_check_branch
          %169 = sbr.rel (%p167) target = $region28
        $region27: #{tpu_custom_call.1} parent=23 // pred_region
          %p170 = scmp.lt.s32.totalorder %s21, 1
          %s171 = scalar_select %p170, %s21, 1
          %s172 = smul.addr %s171, 3
          %s173 = smul.addr %s172, 8
          %s174 = scalar_lea.vmem %s0, %s173
        $region28: #{tpu_custom_call.1} parent=23 // pred_fallthru
          _
      $region24: #{tpu_custom_call.1} parent=5 // pred_fallthru
        _
      %p175 = scmp.le.s32.totalorder 1, %s14
      %p176 = scmp.lt.s32.totalorder %s14, 3
      %p177 = pnand %p175, %p176
      %p178 = pneg %p177
      // Predicated region
      $region29: #{tpu_custom_call.1} parent=5 // pred_check
        _
      $region30: #{tpu_custom_call.1} parent=5 // pred_check_branch
        %180 = sbr.rel (%p177) target = $region32
      $region31: #{tpu_custom_call.1} parent=5 // pred_region
        %s181 = ssub.s32 %s14, 1
        // Predicated region
        $region33: #{tpu_custom_call.1} parent=31 // pred_check
          %p182 = pneg %p73
        $region34: #{tpu_custom_call.1} parent=31 // pred_check_branch
          %184 = sbr.rel (%p182) target = $region36
        $region35: #{tpu_custom_call.1} parent=31 // pred_region
          %185 = dma.done [#allocation3], 2048
        $region36: #{tpu_custom_call.1} parent=31 // pred_fallthru
          _
        // Predicated region
        $region37: #{tpu_custom_call.1} parent=31 // pred_check
          %p186 = pneg %p94
        $region38: #{tpu_custom_call.1} parent=31 // pred_check_branch
          %188 = sbr.rel (%p186) target = $region40
        $region39: #{tpu_custom_call.1} parent=31 // pred_region
          %189 = dma.done [#allocation6], 2048
        $region40: #{tpu_custom_call.1} parent=31 // pred_fallthru
          _
        %p190 = scmp.lt.s32.totalorder %s23, 1
        %s191 = scalar_select %p190, %s23, 1
        %s192 = smul.addr %s191, 3
        %s193 = smul.addr %s192, 8
        %s194 = scalar_lea.vmem %s0, %s193
        %p195 = pneg %p52
        %p196 = pneg %p49
        %p197 = pneg %p73
        %p198 = pneg %p70
        %p199 = pneg %p94
        %p200 = pneg %p91
        %p201 = pneg %p122
        %p202 = pneg %p119
        %s203 = sand.u32 %s109, 1
        %s204 = scalar_lea.sflag [#allocation4], %s203
        %s205 = sand.u32 %s109, 1
        %s206 = smul.addr %s205, 16
        %s207 = scalar_lea.vmem [#allocation7], %s206
        %p208 = scmp.lt.s32.totalorder %s23, 1
        %s209 = scalar_select %p208, %s23, 1
        %s210 = smul.addr %s209, 3
        %s211 = smul.addr %s210, 8
        %s212 = scalar_lea.vmem %s0, %s211
        %s213 = smul.u32 2, %s24
        %s214 = smul.u32 %s24, 16
        %s215 = scalar_lea.vmem %s212, %s214
        %v216 = vld [vmem:[%s215] sm:$0xff]
        %v217 = vld [vmem:[%s215 + $0x8] sm:$0xff]
        %v218 = vld [vmem:[#allocation2] sm:$0xff]
        %v219 = vld [vmem:[#allocation2 + $0x8] sm:$0xff]
        %v220 = vld [vmem:[#allocation2 + $0x10] sm:$0xff]
        %v221 = vld [vmem:[#allocation2 + $0x18] sm:$0xff]
        %s222 = sadd.s32 %s214, 1
        %s223 = scalar_lea.vmem %s212, %s222
        %v224 = vld [vmem:[%s223] sm:$0xff]
        %v225 = vld [vmem:[%s223 + $0x8] sm:$0xff]
        %v226 = vld [vmem:[#allocation2 + $0x20] sm:$0xff]
        %v227 = vld [vmem:[#allocation2 + $0x28] sm:$0xff]
        %v228 = vld [vmem:[#allocation2 + $0x30] sm:$0xff]
        %v229 = vld [vmem:[#allocation2 + $0x38] sm:$0xff]
        %vm230 = vcmask 130048
        %v232 = vsel %vm230, %v224, 0
        %v235 = vsel %vm230, %v225, 0
        %237 = vmatprep.subr.mxu0 0.0
        %238 = vmatpush1.msra.mxu0 0.0
        %239 = vmatprep.subr.mxu0 0.0
        %240 = vmatpush1.msra.mxu0 0.0
        %241 = vmatprep.subr.mxu0 0.0
        %242 = vmatpush1.msra.mxu0 0.0
        %243 = vmatprep.subr.mxu0 0.0
        %244 = vmatpush1.msra.mxu0 0.0
        %245 = vmatprep.subr.mxu0 0.0
        %246 = vmatpush1.msra.mxu0 0.0
        %247 = vmatprep.subr.mxu0 0.0
        %248 = vmatpush1.msra.mxu0 0.0
        %249 = vmatprep.subr.mxu0 0.0
        %250 = vmatpush1.msra.mxu0 0.0
        %251 = vmatprep.subr.mxu0 0.0
        %252 = vmatpush1.msra.mxu0 0.0
        %253 = vmatprep.subr.mxu0 0.0
        %254 = vmatpush1.msra.mxu0 0.0
        %255 = vmatprep.subr.mxu0 0.0
        %256 = vmatpush1.msra.mxu0 0.0
        %257 = vmatprep.subr.mxu0 0.0
        %258 = vmatpush1.msra.mxu0 0.0
        %259 = vmatprep.subr.mxu0 0.0
        %260 = vmatpush1.msra.mxu0 0.0
        %261 = vmatprep.subr.mxu0 0.0
        %262 = vmatpush1.msra.mxu0 0.0
        %263 = vmatprep.subr.mxu0 0.0
        %264 = vmatpush1.msra.mxu0 0.0
        %265 = vmatprep.subr.mxu0 %v229
        %266 = vmatpush1.msra.mxu0 %v228
        %267 = vmatprep.subr.mxu0 %v227
        %268 = vmatpush1.msra.mxu0 %v226
        %269 = vmatprep.subr.mxu0 0.0
        %270 = vmatpush2.msra.mxu0 0.0
        %271 = vmatprep.subr.mxu0 0.0
        %272 = vmatpush2.msra.mxu0 0.0
        %273 = vmatprep.subr.mxu0 0.0
        %274 = vmatpush2.msra.mxu0 0.0
        %275 = vmatprep.subr.mxu0 0.0
        %276 = vmatpush2.msra.mxu0 0.0
        %277 = vmatprep.subr.mxu0 0.0
        %278 = vmatpush2.msra.mxu0 0.0
        %279 = vmatprep.subr.mxu0 0.0
        %280 = vmatpush2.msra.mxu0 0.0
        %281 = vmatprep.subr.mxu0 0.0
        %282 = vmatpush2.msra.mxu0 0.0
        %283 = vmatprep.subr.mxu0 0.0
        %284 = vmatpush2.msra.mxu0 0.0
        %285 = vmatprep.subr.mxu0 0.0
        %286 = vmatpush2.msra.mxu0 0.0
        %287 = vmatprep.subr.mxu0 0.0
        %288 = vmatpush2.msra.mxu0 0.0
        %289 = vmatprep.subr.mxu0 0.0
        %290 = vmatpush2.msra.mxu0 0.0
        %291 = vmatprep.subr.mxu0 0.0
        %292 = vmatpush2.msra.mxu0 0.0
        %293 = vmatprep.subr.mxu0 0.0
        %294 = vmatpush2.msra.mxu0 0.0
        %295 = vmatprep.subr.mxu0 0.0
        %296 = vmatpush2.msra.mxu0 0.0
        %297 = vmatprep.subr.mxu0 0.0
        %298 = vmatpush2.msra.mxu0 0.0
        %299 = vmatprep.subr.mxu0 0.0
        %300 = vmatpush2.msra.mxu0 0.0
        %301 = vmatprep.mubr.f32.mxu0 0.0
        %302 = vmatmul.mubr.f32.gmra.mxu0 %v232
        %v303 = vpop.f32.mrf.mxu0
        %v304 = vadd.f32 0.0, %v303
        %v305 = vpop.f32.mrf.mxu0
        %v306 = vadd.f32 0.0, %v305
        %307 = vmatprep.mubr.f32.mxu0 0.0
        %308 = vmatmul.mubr.f32.gmra.mxu0 %v235
        %v309 = vpop.f32.mrf.mxu0
        %v310 = vadd.f32 0.0, %v309
        %v311 = vpop.f32.mrf.mxu0
        %v312 = vadd.f32 0.0, %v311
        %313 = vdwg.mxu0
        %v315 = vsel %vm230, %v216, 0
        %v318 = vsel %vm230, %v217, 0
        %320 = vmatprep.subr.mxu0 0.0
        %321 = vmatpush1.msra.mxu0 0.0
        %322 = vmatprep.subr.mxu0 0.0
        %323 = vmatpush1.msra.mxu0 0.0
        %324 = vmatprep.subr.mxu0 0.0
        %325 = vmatpush1.msra.mxu0 0.0
        %326 = vmatprep.subr.mxu0 0.0
        %327 = vmatpush1.msra.mxu0 0.0
        %328 = vmatprep.subr.mxu0 0.0
        %329 = vmatpush1.msra.mxu0 0.0
        %330 = vmatprep.subr.mxu0 0.0
        %331 = vmatpush1.msra.mxu0 0.0
        %332 = vmatprep.subr.mxu0 0.0
        %333 = vmatpush1.msra.mxu0 0.0
        %334 = vmatprep.subr.mxu0 0.0
        %335 = vmatpush1.msra.mxu0 0.0
        %336 = vmatprep.subr.mxu0 0.0
        %337 = vmatpush1.msra.mxu0 0.0
        %338 = vmatprep.subr.mxu0 0.0
        %339 = vmatpush1.msra.mxu0 0.0
        %340 = vmatprep.subr.mxu0 0.0
        %341 = vmatpush1.msra.mxu0 0.0
        %342 = vmatprep.subr.mxu0 0.0
        %343 = vmatpush1.msra.mxu0 0.0
        %344 = vmatprep.subr.mxu0 0.0
        %345 = vmatpush1.msra.mxu0 0.0
        %346 = vmatprep.subr.mxu0 0.0
        %347 = vmatpush1.msra.mxu0 0.0
        %348 = vmatprep.subr.mxu0 %v221
        %349 = vmatpush1.msra.mxu0 %v220
        %350 = vmatprep.subr.mxu0 %v219
        %351 = vmatpush1.msra.mxu0 %v218
        %352 = vmatprep.subr.mxu0 0.0
        %353 = vmatpush2.msra.mxu0 0.0
        %354 = vmatprep.subr.mxu0 0.0
        %355 = vmatpush2.msra.mxu0 0.0
        %356 = vmatprep.subr.mxu0 0.0
        %357 = vmatpush2.msra.mxu0 0.0
        %358 = vmatprep.subr.mxu0 0.0
        %359 = vmatpush2.msra.mxu0 0.0
        %360 = vmatprep.subr.mxu0 0.0
        %361 = vmatpush2.msra.mxu0 0.0
        %362 = vmatprep.subr.mxu0 0.0
        %363 = vmatpush2.msra.mxu0 0.0
        %364 = vmatprep.subr.mxu0 0.0
        %365 = vmatpush2.msra.mxu0 0.0
        %366 = vmatprep.subr.mxu0 0.0
        %367 = vmatpush2.msra.mxu0 0.0
        %368 = vmatprep.subr.mxu0 0.0
        %369 = vmatpush2.msra.mxu0 0.0
        %370 = vmatprep.subr.mxu0 0.0
        %371 = vmatpush2.msra.mxu0 0.0
        %372 = vmatprep.subr.mxu0 0.0
        %373 = vmatpush2.msra.mxu0 0.0
        %374 = vmatprep.subr.mxu0 0.0
        %375 = vmatpush2.msra.mxu0 0.0
        %376 = vmatprep.subr.mxu0 0.0
        %377 = vmatpush2.msra.mxu0 0.0
        %378 = vmatprep.subr.mxu0 0.0
        %379 = vmatpush2.msra.mxu0 0.0
        %380 = vmatprep.subr.mxu0 0.0
        %381 = vmatpush2.msra.mxu0 0.0
        %382 = vmatprep.subr.mxu0 0.0
        %383 = vmatpush2.msra.mxu0 0.0
        %384 = vmatprep.mubr.f32.mxu0 0.0
        %385 = vmatmul.mubr.f32.gmra.mxu0 %v315
        %v386 = vpop.f32.mrf.mxu0
        %v387 = vadd.f32 %v304, %v386
        %v388 = vpop.f32.mrf.mxu0
        %v389 = vadd.f32 %v306, %v388
        %390 = vmatprep.mubr.f32.mxu0 0.0
        %391 = vmatmul.mubr.f32.gmra.mxu0 %v318
        %v392 = vpop.f32.mrf.mxu0
        %v393 = vadd.f32 %v310, %v392
        %v394 = vpop.f32.mrf.mxu0
        %v395 = vadd.f32 %v312, %v394
        %396 = vdwg.mxu0
        %s397 = sadd.s32 %s214, 2
        %s398 = scalar_lea.vmem %s212, %s397
        %v399 = vld [vmem:[%s398] sm:$0xff]
        %v400 = vld [vmem:[%s398 + $0x8] sm:$0xff]
        %v401 = vld [vmem:[#allocation2 + $0x40] sm:$0xff]
        %v402 = vld [vmem:[#allocation2 + $0x48] sm:$0xff]
        %v403 = vld [vmem:[#allocation2 + $0x50] sm:$0xff]
        %v404 = vld [vmem:[#allocation2 + $0x58] sm:$0xff]
        %v406 = vsel %vm230, %v399, 0
        %v409 = vsel %vm230, %v400, 0
        %411 = vmatprep.subr.mxu0 0.0
        %412 = vmatpush1.msra.mxu0 0.0
        %413 = vmatprep.subr.mxu0 0.0
        %414 = vmatpush1.msra.mxu0 0.0
        %415 = vmatprep.subr.mxu0 0.0
        %416 = vmatpush1.msra.mxu0 0.0
        %417 = vmatprep.subr.mxu0 0.0
        %418 = vmatpush1.msra.mxu0 0.0
        %419 = vmatprep.subr.mxu0 0.0
        %420 = vmatpush1.msra.mxu0 0.0
        %421 = vmatprep.subr.mxu0 0.0
        %422 = vmatpush1.msra.mxu0 0.0
        %423 = vmatprep.subr.mxu0 0.0
        %424 = vmatpush1.msra.mxu0 0.0
        %425 = vmatprep.subr.mxu0 0.0
        %426 = vmatpush1.msra.mxu0 0.0
        %427 = vmatprep.subr.mxu0 0.0
        %428 = vmatpush1.msra.mxu0 0.0
        %429 = vmatprep.subr.mxu0 0.0
        %430 = vmatpush1.msra.mxu0 0.0
        %431 = vmatprep.subr.mxu0 0.0
        %432 = vmatpush1.msra.mxu0 0.0
        %433 = vmatprep.subr.mxu0 0.0
        %434 = vmatpush1.msra.mxu0 0.0
        %435 = vmatprep.subr.mxu0 0.0
        %436 = vmatpush1.msra.mxu0 0.0
        %437 = vmatprep.subr.mxu0 0.0
        %438 = vmatpush1.msra.mxu0 0.0
        %439 = vmatprep.subr.mxu0 %v404
        %440 = vmatpush1.msra.mxu0 %v403
        %441 = vmatprep.subr.mxu0 %v402
        %442 = vmatpush1.msra.mxu0 %v401
        %443 = vmatprep.subr.mxu0 0.0
        %444 = vmatpush2.msra.mxu0 0.0
        %445 = vmatprep.subr.mxu0 0.0
        %446 = vmatpush2.msra.mxu0 0.0
        %447 = vmatprep.subr.mxu0 0.0
        %448 = vmatpush2.msra.mxu0 0.0
        %449 = vmatprep.subr.mxu0 0.0
        %450 = vmatpush2.msra.mxu0 0.0
        %451 = vmatprep.subr.mxu0 0.0
        %452 = vmatpush2.msra.mxu0 0.0
        %453 = vmatprep.subr.mxu0 0.0
        %454 = vmatpush2.msra.mxu0 0.0
        %455 = vmatprep.subr.mxu0 0.0
        %456 = vmatpush2.msra.mxu0 0.0
        %457 = vmatprep.subr.mxu0 0.0
        %458 = vmatpush2.msra.mxu0 0.0
        %459 = vmatprep.subr.mxu0 0.0
        %460 = vmatpush2.msra.mxu0 0.0
        %461 = vmatprep.subr.mxu0 0.0
        %462 = vmatpush2.msra.mxu0 0.0
        %463 = vmatprep.subr.mxu0 0.0
        %464 = vmatpush2.msra.mxu0 0.0
        %465 = vmatprep.subr.mxu0 0.0
        %466 = vmatpush2.msra.mxu0 0.0
        %467 = vmatprep.subr.mxu0 0.0
        %468 = vmatpush2.msra.mxu0 0.0
        %469 = vmatprep.subr.mxu0 0.0
        %470 = vmatpush2.msra.mxu0 0.0
        %471 = vmatprep.subr.mxu0 0.0
        %472 = vmatpush2.msra.mxu0 0.0
        %473 = vmatprep.subr.mxu0 0.0
        %474 = vmatpush2.msra.mxu0 0.0
        %475 = vmatprep.mubr.f32.mxu0 0.0
        %476 = vmatmul.mubr.f32.gmra.mxu0 %v406
        %v477 = vpop.f32.mrf.mxu0
        %v478 = vadd.f32 0.0, %v477
        %v479 = vpop.f32.mrf.mxu0
        %v480 = vadd.f32 0.0, %v479
        %481 = vmatprep.mubr.f32.mxu0 0.0
        %482 = vmatmul.mubr.f32.gmra.mxu0 %v409
        %v483 = vpop.f32.mrf.mxu0
        %v484 = vadd.f32 0.0, %v483
        %v485 = vpop.f32.mrf.mxu0
        %v486 = vadd.f32 0.0, %v485
        %487 = vdwg.mxu0
        %v488 = vadd.f32 %v387, %v478
        %v489 = vadd.f32 %v389, %v480
        %v490 = vadd.f32 %v393, %v484
        %v491 = vadd.f32 %v395, %v486
        %s492 = sadd.s32 %s214, 3
        %s493 = scalar_lea.vmem %s212, %s492
        %v494 = vld [vmem:[%s493] sm:$0xff]
        %v495 = vld [vmem:[%s493 + $0x8] sm:$0xff]
        %v496 = vld [vmem:[#allocation2 + $0x60] sm:$0xff]
        %v497 = vld [vmem:[#allocation2 + $0x68] sm:$0xff]
        %v498 = vld [vmem:[#allocation2 + $0x70] sm:$0xff]
        %v499 = vld [vmem:[#allocation2 + $0x78] sm:$0xff]
        %v501 = vsel %vm230, %v494, 0
        %v504 = vsel %vm230, %v495, 0
        %506 = vmatprep.subr.mxu0 0.0
        %507 = vmatpush1.msra.mxu0 0.0
        %508 = vmatprep.subr.mxu0 0.0
        %509 = vmatpush1.msra.mxu0 0.0
        %510 = vmatprep.subr.mxu0 0.0
        %511 = vmatpush1.msra.mxu0 0.0
        %512 = vmatprep.subr.mxu0 0.0
        %513 = vmatpush1.msra.mxu0 0.0
        %514 = vmatprep.subr.mxu0 0.0
        %515 = vmatpush1.msra.mxu0 0.0
        %516 = vmatprep.subr.mxu0 0.0
        %517 = vmatpush1.msra.mxu0 0.0
        %518 = vmatprep.subr.mxu0 0.0
        %519 = vmatpush1.msra.mxu0 0.0
        %520 = vmatprep.subr.mxu0 0.0
        %521 = vmatpush1.msra.mxu0 0.0
        %522 = vmatprep.subr.mxu0 0.0
        %523 = vmatpush1.msra.mxu0 0.0
        %524 = vmatprep.subr.mxu0 0.0
        %525 = vmatpush1.msra.mxu0 0.0
        %526 = vmatprep.subr.mxu0 0.0
        %527 = vmatpush1.msra.mxu0 0.0
        %528 = vmatprep.subr.mxu0 0.0
        %529 = vmatpush1.msra.mxu0 0.0
        %530 = vmatprep.subr.mxu0 0.0
        %531 = vmatpush1.msra.mxu0 0.0
        %532 = vmatprep.subr.mxu0 0.0
        %533 = vmatpush1.msra.mxu0 0.0
        %534 = vmatprep.subr.mxu0 %v499
        %535 = vmatpush1.msra.mxu0 %v498
        %536 = vmatprep.subr.mxu0 %v497
        %537 = vmatpush1.msra.mxu0 %v496
        %538 = vmatprep.subr.mxu0 0.0
        %539 = vmatpush2.msra.mxu0 0.0
        %540 = vmatprep.subr.mxu0 0.0
        %541 = vmatpush2.msra.mxu0 0.0
        %542 = vmatprep.subr.mxu0 0.0
        %543 = vmatpush2.msra.mxu0 0.0
        %544 = vmatprep.subr.mxu0 0.0
        %545 = vmatpush2.msra.mxu0 0.0
        %546 = vmatprep.subr.mxu0 0.0
        %547 = vmatpush2.msra.mxu0 0.0
        %548 = vmatprep.subr.mxu0 0.0
        %549 = vmatpush2.msra.mxu0 0.0
        %550 = vmatprep.subr.mxu0 0.0
        %551 = vmatpush2.msra.mxu0 0.0
        %552 = vmatprep.subr.mxu0 0.0
        %553 = vmatpush2.msra.mxu0 0.0
        %554 = vmatprep.subr.mxu0 0.0
        %555 = vmatpush2.msra.mxu0 0.0
        %556 = vmatprep.subr.mxu0 0.0
        %557 = vmatpush2.msra.mxu0 0.0
        %558 = vmatprep.subr.mxu0 0.0
        %559 = vmatpush2.msra.mxu0 0.0
        %560 = vmatprep.subr.mxu0 0.0
        %561 = vmatpush2.msra.mxu0 0.0
        %562 = vmatprep.subr.mxu0 0.0
        %563 = vmatpush2.msra.mxu0 0.0
        %564 = vmatprep.subr.mxu0 0.0
        %565 = vmatpush2.msra.mxu0 0.0
        %566 = vmatprep.subr.mxu0 0.0
        %567 = vmatpush2.msra.mxu0 0.0
        %568 = vmatprep.subr.mxu0 0.0
        %569 = vmatpush2.msra.mxu0 0.0
        %570 = vmatprep.mubr.f32.mxu0 0.0
        %571 = vmatmul.mubr.f32.gmra.mxu0 %v501
        %v572 = vpop.f32.mrf.mxu0
        %v573 = vadd.f32 0.0, %v572
        %v574 = vpop.f32.mrf.mxu0
        %v575 = vadd.f32 0.0, %v574
        %576 = vmatprep.mubr.f32.mxu0 0.0
        %577 = vmatmul.mubr.f32.gmra.mxu0 %v504
        %v578 = vpop.f32.mrf.mxu0
        %v579 = vadd.f32 0.0, %v578
        %v580 = vpop.f32.mrf.mxu0
        %v581 = vadd.f32 0.0, %v580
        %582 = vdwg.mxu0
        %v583 = vadd.f32 %v488, %v573
        %v584 = vadd.f32 %v489, %v575
        %v585 = vadd.f32 %v490, %v579
        %v586 = vadd.f32 %v491, %v581
        %v587 = vmul.f32 %v583, %v583
        %v588 = vmul.f32 %v585, %v585
        %v589 = vmul.f32 %v584, %v584
        %v590 = vmul.f32 %v586, %v586
        %v591 = vadd.f32 %v587, %v589
        %v592 = vadd.f32 %v588, %v590
        %v593 = vld [vmem:[#allocation5] sm:$0xff]
        %v594 = vld [vmem:[#allocation5 + $0x8] sm:$0xff]
        %v595 = vld [vmem:[#allocation5 + $0x10] sm:$0xff]
        %v596 = vld [vmem:[#allocation5 + $0x18] sm:$0xff]
        %v597 = vld [vmem:[#allocation5 + $0x20] sm:$0xff]
        %v598 = vld [vmem:[#allocation5 + $0x28] sm:$0xff]
        %v599 = vld [vmem:[#allocation5 + $0x30] sm:$0xff]
        %v600 = vld [vmem:[#allocation5 + $0x38] sm:$0xff]
        %v601 = vld [vmem:[#allocation5 + $0x40] sm:$0xff]
        %v602 = vld [vmem:[#allocation5 + $0x48] sm:$0xff]
        %v603 = vld [vmem:[#allocation5 + $0x50] sm:$0xff]
        %v604 = vld [vmem:[#allocation5 + $0x58] sm:$0xff]
        %v605 = vld [vmem:[#allocation5 + $0x60] sm:$0xff]
        %v606 = vld [vmem:[#allocation5 + $0x68] sm:$0xff]
        %v607 = vld [vmem:[#allocation5 + $0x70] sm:$0xff]
        %v608 = vld [vmem:[#allocation5 + $0x78] sm:$0xff]
        %609 = vmatprep.subr.mxu0 0.0
        %610 = vmatpush1.msra.mxu0 %v608
        %611 = vmatprep.subr.mxu0 0.0
        %612 = vmatpush1.msra.mxu0 %v607
        %613 = vmatprep.subr.mxu0 0.0
        %614 = vmatpush1.msra.mxu0 %v606
        %615 = vmatprep.subr.mxu0 0.0
        %616 = vmatpush1.msra.mxu0 %v605
        %617 = vmatprep.subr.mxu0 0.0
        %618 = vmatpush1.msra.mxu0 %v604
        %619 = vmatprep.subr.mxu0 0.0
        %620 = vmatpush1.msra.mxu0 %v603
        %621 = vmatprep.subr.mxu0 0.0
        %622 = vmatpush1.msra.mxu0 %v602
        %623 = vmatprep.subr.mxu0 0.0
        %624 = vmatpush1.msra.mxu0 %v601
        %625 = vmatprep.subr.mxu0 0.0
        %626 = vmatpush1.msra.mxu0 %v600
        %627 = vmatprep.subr.mxu0 0.0
        %628 = vmatpush1.msra.mxu0 %v599
        %629 = vmatprep.subr.mxu0 0.0
        %630 = vmatpush1.msra.mxu0 %v598
        %631 = vmatprep.subr.mxu0 0.0
        %632 = vmatpush1.msra.mxu0 %v597
        %633 = vmatprep.subr.mxu0 0.0
        %634 = vmatpush1.msra.mxu0 %v596
        %635 = vmatprep.subr.mxu0 0.0
        %636 = vmatpush1.msra.mxu0 %v595
        %637 = vmatprep.subr.mxu0 0.0
        %638 = vmatpush1.msra.mxu0 %v594
        %639 = vmatprep.subr.mxu0 0.0
        %640 = vmatpush1.msra.mxu0 %v593
        %641 = vmatprep.subr.mxu0 0.0
        %642 = vmatpush2.msra.mxu0 0.0
        %643 = vmatprep.subr.mxu0 0.0
        %644 = vmatpush2.msra.mxu0 0.0
        %645 = vmatprep.subr.mxu0 0.0
        %646 = vmatpush2.msra.mxu0 0.0
        %647 = vmatprep.subr.mxu0 0.0
        %648 = vmatpush2.msra.mxu0 0.0
        %649 = vmatprep.subr.mxu0 0.0
        %650 = vmatpush2.msra.mxu0 0.0
        %651 = vmatprep.subr.mxu0 0.0
        %652 = vmatpush2.msra.mxu0 0.0
        %653 = vmatprep.subr.mxu0 0.0
        %654 = vmatpush2.msra.mxu0 0.0
        %655 = vmatprep.subr.mxu0 0.0
        %656 = vmatpush2.msra.mxu0 0.0
        %657 = vmatprep.subr.mxu0 0.0
        %658 = vmatpush2.msra.mxu0 0.0
        %659 = vmatprep.subr.mxu0 0.0
        %660 = vmatpush2.msra.mxu0 0.0
        %661 = vmatprep.subr.mxu0 0.0
        %662 = vmatpush2.msra.mxu0 0.0
        %663 = vmatprep.subr.mxu0 0.0
        %664 = vmatpush2.msra.mxu0 0.0
        %665 = vmatprep.subr.mxu0 0.0
        %666 = vmatpush2.msra.mxu0 0.0
        %667 = vmatprep.subr.mxu0 0.0
        %668 = vmatpush2.msra.mxu0 0.0
        %669 = vmatprep.subr.mxu0 0.0
        %670 = vmatpush2.msra.mxu0 0.0
        %671 = vmatprep.subr.mxu0 0.0
        %672 = vmatpush2.msra.mxu0 0.0
        %673 = vmatprep.mubr.f32.mxu0 0.0
        %674 = vmatmul.mubr.f32.gmra.mxu0 %v591
        %v675 = vpop.f32.mrf.mxu0
        %v676 = vadd.f32 0.001, %v675
        %v677 = vpop.f32.mrf.mxu0
        %678 = vmatprep.mubr.f32.mxu0 0.0
        %679 = vmatmul.mubr.f32.gmra.mxu0 %v592
        %v680 = vpop.f32.mrf.mxu0
        %v681 = vadd.f32 0.001, %v680
        %v682 = vpop.f32.mrf.mxu0
        %683 = vdwg.mxu0
        %v684 = vlog2.pop %v676
        %v685 = vmul.f32 %v684, 0.6931472
        %v686 = vlog2.pop %v681
        %v687 = vmul.f32 %v686, 0.6931472
        %688 = vst [vmem:[%s207] sm:$0xff] %v685
        %689 = vst [vmem:[%s207 + $0x8] sm:$0xff] %v687
        %s690 = sand.u32 %s109, 1
        %s691 = scalar_lea.sflag [#allocation4], %s690
        %s692 = sand.u32 %s109, 1
        %s693 = smul.addr %s692, 16
        %s694 = scalar_lea.vmem [#allocation7], %s693
        // Predicated region
        $region41: #{tpu_custom_call.1} parent=31 // pred_check
          %p695 = pneg %p119
        $region42: #{tpu_custom_call.1} parent=31 // pred_check_branch
          %697 = sbr.rel (%p695) target = $region44
        $region43: #{tpu_custom_call.1} parent=31 // pred_region
          %s698 = smul.u32 2, %s24
          %s700 = ssub.s32 256, 256
          %701 = vsyncadd %s691, %s700
          %s702 = smul.addr %s23, 2
          %s703 = sadd.s32 %s698, %s702
          %s704 = smul.addr %s703, 128
          %s705 = scalar_lea.hbm %s3, %s704
          %s706 = sshll.u32 %s694, 4
          %s707 = int_to_ptr.vmem [resolvable:$true] %s706
          %712 = dma.vmem_to_hbm [thread:$0]  %s707, 256, %s705, %s691, 128, 128, 8
        $region44: #{tpu_custom_call.1} parent=31 // pred_fallthru
          _
      $region32: #{tpu_custom_call.1} parent=5 // pred_fallthru
        _
      %p713 = scmp.le.s32.totalorder 2, %s14
      // Predicated region
      $region45: #{tpu_custom_call.1} parent=5 // pred_check
        %p714 = pneg %p713
      $region46: #{tpu_custom_call.1} parent=5 // pred_check_branch
        %716 = sbr.rel (%p714) target = $region48
      $region47: #{tpu_custom_call.1} parent=5 // pred_region
        %s717 = ssub.s32 %s14, 2
        // Predicated region
        $region49: #{tpu_custom_call.1} parent=47 // pred_check
          %p718 = pneg %p125
        $region50: #{tpu_custom_call.1} parent=47 // pred_check_branch
          %720 = sbr.rel (%p718) target = $region52
        $region51: #{tpu_custom_call.1} parent=47 // pred_region
          %s721 = sand.u32 %s110, 1
          %s722 = scalar_lea.sflag [#allocation4], %s721
          %s723 = sand.u32 %s110, 1
          %s724 = smul.addr %s723, 16
          %s725 = scalar_lea.vmem [#allocation7], %s724
          %726 = dma.done %s722, 256
        $region52: #{tpu_custom_call.1} parent=47 // pred_fallthru
          _
      $region48: #{tpu_custom_call.1} parent=5 // pred_fallthru
        _
    $region6: #{tpu_custom_call.1} parent=1 // loop_footer
      %s18 = sadd.s32 1, %s14
    $region7: #{tpu_custom_call.1} parent=1 // loop_footer_branch
      %13 = sbr.rel target = $region3
    $region8: #{tpu_custom_call.1} parent=1 // loop_exit
      _
    %727 = vsyncpa [#allocation3], 1
    %s728 = scalar_lea.sflag [#allocation3], 1
    %729 = vsyncpa %s728, 1
    %730 = vsyncpa [#allocation6], 1
    %731 = vsyncpa [#allocation4], 1
    %s732 = scalar_lea.sflag [#allocation4], 1
    %733 = vsyncpa %s732, 1

</llo_original>
